<compile_context>
chip_gen: v7x
topology: tpu7x:2x2x1
jax: 0.10.0
libtpu: 0.0.40
codegen_flags: <defaults>
</compile_context>

<pallas_src>
import jax
import jax.numpy as jnp
from jax.experimental import pallas as pl
from jax.experimental.pallas import tpu as pltpu


# ---------------------------------------------------------------------------
# Chip introspection: VMEM capacity + TensorCore count drive block sizing.
# ---------------------------------------------------------------------------
def _chip_config():
    """Returns (vmem_capacity_bytes, tensorcores_per_device)."""
    kind = ""
    try:
        kind = jax.devices()[0].device_kind.lower()
    except Exception:
        pass
    is_v7 = "v7" in kind
    vmem = None
    try:
        vmem = int(pltpu.get_tpu_info().vmem_capacity_bytes)
    except Exception:
        vmem = None
    if not vmem or vmem <= 0:
        vmem = (64 << 20) if is_v7 else (128 << 20)
    # v7x has 2 TensorCores per chip; v4/v5p expose a 2-TC megacore.
    # v5e / v6e are single-TC: sharding the grid buys nothing there.
    multi_tc = is_v7 or ("v4" in kind) or ("v5p" in kind)
    return vmem, (2 if multi_tc else 1)


def _pick_block_batch(n, slab_bytes, budget_bytes, num_tc):
    """Batch-block size Nb for (Nb, C, HW) tiles.

    Returns 0 if a single batch slab already exceeds the budget (the caller
    switches to the spatially tiled two-pass path).  Single-TC chips take the
    largest Nb that fits — fewer, bigger steps means less per-step overhead.
    Multi-TC chips aim for a balanced step count that is a multiple of the
    core count so no core idles on a trailing step.
    """
    if slab_bytes > budget_bytes:
        return 0
    nb_max = max(1, min(n, budget_bytes // slab_bytes))
    if num_tc <= 1 or n <= 1:
        return nb_max
    min_steps = -(-n // nb_max)                       # ceil(n / nb_max)
    target_steps = -(-min_steps // num_tc) * num_tc   # round up to k*num_tc
    return -(-n // target_steps)                      # balanced block size


def _const_spec(shape, index_map, single_buffer):
    """BlockSpec for grid-invariant weight/bias tiles.

    Their index_map never changes, so a single VMEM buffer suffices
    (pl.Buffered(1)).  Fall back to the default double-buffered spec when this
    JAX/Mosaic build does not support pipeline_mode.
    """
    if single_buffer:
        try:
            return pl.BlockSpec(shape, index_map, pipeline_mode=pl.Buffered(1))
        except Exception:
            pass
    return pl.BlockSpec(shape, index_map)


# ---------------------------------------------------------------------------
# CALayer forward.
# ---------------------------------------------------------------------------
def ca_layer_pallas(x_nchw, params, block_budget_bytes=None):
    """x_nchw: (N, C, H, W). Returns x * channel_attention(x).

    `block_budget_bytes` is a test hook to force the two-pass fallback.
    Intended to be called eagerly (the Buffered(1) fallback relies on catching
    compile errors at call time).
    """
    N, C, H, W = x_nchw.shape
    HW = H * W
    # HW sits on the lane axis of every block: when HW % 128 == 0 the output
    # store is a full-width unmasked vst.  Odd spatial sizes still work (masked
    # stores); we deliberately do NOT pad in HBM — that would add a full extra
    # memory pass to a purely HBM-bound kernel.
    x = x_nchw.reshape(N, C, HW)          # free metadata reshape (contiguous)

    Cr = params["w1"].shape[0]            # channel // reduction
    C3 = 3 * Cr

    def center(w):                        # (Cout, Cin, 3, 3) -> (Cout, Cin)
        return w[:, :, 1, 1]

    # Host-side weight prep: fuse the three dilated "squeeze" convs into one
    # (C, 3Cr) matmul and the "excite" conv into one (3Cr, C) matmul.
    w_in = jnp.transpose(
        jnp.concatenate([center(params["w1"]), center(params["w2"]),
                         center(params["w3"])], axis=0), (1, 0))       # (C, 3Cr)
    b_in = jnp.concatenate(
        [params["b1"], params["b2"], params["b3"]]).reshape(1, C3)
    w_out = jnp.transpose(center(params["w4"]), (1, 0))                # (3Cr, C)
    b_out = params["b4"].reshape(1, C)

    weight_args = (w_in, b_in, w_out, b_out)
    weight_shapes = ((C, C3), (1, C3), (C3, C), (1, C))

    itemsize = jnp.dtype(x_nchw.dtype).itemsize
    vmem_cap, num_tc = _chip_config()
    # Per-block budget: ~16 MiB on 128-MiB VMEM chips (v5e/v6e), ~8 MiB on
    # 64-MiB v7x.  Input + output are double-buffered => 4x this in flight.
    budget = block_budget_bytes or max(1 << 20, vmem_cap // 8)
    vmem_ceiling = int(vmem_cap * 0.85)   # never request more than exists
    slab_bytes = C * HW * itemsize
    w_bytes = 4 * (w_in.size + b_in.size + w_out.size + b_out.size)

    def vmem_limit(block_bytes, n_big_buffers):
        need = n_big_buffers * block_bytes + 2 * w_bytes + (2 << 20)
        return min(max(need, 32 << 20), vmem_ceiling)

    nb = _pick_block_batch(N, slab_bytes, budget, num_tc)

    if nb > 0:
        # ----------------- single-pass fused kernel (common case) ----------
        grid = (pl.cdiv(N, nb),)   # ragged last batch block is fine: every op
                                   # is row-local, OOB rows are masked on store

        def kernel(x_ref, w_in_ref, b_in_ref, w_out_ref, b_out_ref, o_ref):
            # x_ref / o_ref: (nb, C, HW) — channels on sublanes, HW on lanes.
            # Global average pool; accumulate in f32 even for bf16 inputs.
            y = jnp.sum(x_ref[...], axis=-1, dtype=jnp.float32) * (1.0 / HW)
            # Squeeze: fused center taps of the three dilated convs + ReLU.
            c = jnp.maximum(
                jnp.dot(y, w_in_ref[...], preferred_element_type=jnp.float32)
                + b_in_ref[...], 0.0)                                 # (nb, 3Cr)
            # Excite: 1x1 center tap + sigmoid -> per-(batch, channel) scale.
            s = jax.nn.sigmoid(
                jnp.dot(c, w_out_ref[...], preferred_element_type=jnp.float32)
                + b_out_ref[...])                                     # (nb, C)
            o_ref[...] = (x_ref[...] * s[:, :, None]).astype(o_ref.dtype)

        def run(single_buffer_weights):
            wspecs = [_const_spec(s, lambda n: (0, 0), single_buffer_weights)
                      for s in weight_shapes]
            return pl.pallas_call(
                kernel,
                out_shape=jax.ShapeDtypeStruct((N, C, HW), x.dtype),
                grid_spec=pltpu.PrefetchScalarGridSpec(
                    num_scalar_prefetch=0,
                    grid=grid,
                    in_specs=[pl.BlockSpec((nb, C, HW),
                                           lambda n: (n, 0, 0))] + wspecs,
                    out_specs=pl.BlockSpec((nb, C, HW), lambda n: (n, 0, 0)),
                ),
                compiler_params=pltpu.CompilerParams(
                    dimension_semantics=("parallel",),
                    vmem_limit_bytes=vmem_limit(nb * slab_bytes, 4)),
            )(x, *weight_args)

        try:
            out = run(True)
        except Exception:   # pipeline_mode/Buffered(1) unsupported -> default
            out = run(False)

    else:
        # ---------- two-pass fallback: one batch slab exceeds the budget ----
        # (e.g. DRLN-scale feature maps on v7x's 64 MiB VMEM.)  Pass 1 tiles
        # HW, accumulates the global-average pool and emits the per-(n, c)
        # sigmoid scale; pass 2 streams x again and rescales.  1.5x the HBM
        # traffic of the fused path, but lane-dense blocks always fit VMEM.
        hw_tile = (budget // (C * itemsize)) // 128 * 128
        hw_tile = min(HW, max(128, hw_tile))
        hw_steps = pl.cdiv(HW, hw_tile)
        ragged_hw = (HW % hw_tile) != 0

        def scale_kernel(x_ref, w_in_ref, b_in_ref, w_out_ref, b_out_ref,
                         s_ref, acc_ref):
            h = pl.program_id(1)

            @pl.when(h == 0)
            def _():
                acc_ref[...] = jnp.zeros_like(acc_ref)

            xb = x_ref[...]                               # (1, C, hw_tile)
            if ragged_hw:  # zero the out-of-range lanes of the last HW tile
                lane = jax.lax.broadcasted_iota(jnp.int32, xb.shape, 2)
                xb = jnp.where(h * hw_tile + lane < HW, xb, 0)
            acc_ref[...] += jnp.sum(xb, axis=-1, dtype=jnp.float32)

            @pl.when(h == pl.num_programs(1) - 1)
            def _():
                y = acc_ref[...] * (1.0 / HW)                          # (1, C)
                c = jnp.maximum(
                    jnp.dot(y, w_in_ref[...],
                            preferred_element_type=jnp.float32)
                    + b_in_ref[...], 0.0)
                s = jax.nn.sigmoid(
                    jnp.dot(c, w_out_ref[...],
                            preferred_element_type=jnp.float32)
                    + b_out_ref[...])
                s_ref[...] = s[:, :, None]                             # (1,C,1)

        def run_scale(single_buffer_weights):
            wspecs = [_const_spec(s, lambda n, h: (0, 0),
                                  single_buffer_weights)
                      for s in weight_shapes]
            return pl.pallas_call(
                scale_kernel,
                out_shape=jax.ShapeDtypeStruct((N, C, 1), jnp.float32),
                grid_spec=pltpu.PrefetchScalarGridSpec(
                    num_scalar_prefetch=0,
                    grid=(N, hw_steps),
                    in_specs=[pl.BlockSpec((1, C, hw_tile),
                                           lambda n, h: (n, 0, h))] + wspecs,
                    out_specs=pl.BlockSpec((1, C, 1), lambda n, h: (n, 0, 0)),
                    scratch_shapes=[pltpu.VMEM((1, C), jnp.float32)],
                ),
                compiler_params=pltpu.CompilerParams(
                    dimension_semantics=("parallel", "arbitrary"),
                    vmem_limit_bytes=vmem_limit(C * hw_tile * itemsize, 2)),
            )(x, *weight_args)

        try:
            scale = run_scale(True)
        except Exception:
            scale = run_scale(False)

        def rescale_kernel(x_ref, s_ref, o_ref):
            o_ref[...] = (x_ref[...] * s_ref[...]).astype(o_ref.dtype)

        out = pl.pallas_call(
            rescale_kernel,
            out_shape=jax.ShapeDtypeStruct((N, C, HW), x.dtype),
            grid_spec=pltpu.PrefetchScalarGridSpec(
                num_scalar_prefetch=0,
                grid=(N, hw_steps),
                in_specs=[pl.BlockSpec((1, C, hw_tile), lambda n, h: (n, 0, h)),
                          pl.BlockSpec((1, C, 1), lambda n, h: (n, 0, 0))],
                out_specs=pl.BlockSpec((1, C, hw_tile), lambda n, h: (n, 0, h)),
            ),
            compiler_params=pltpu.CompilerParams(
                dimension_semantics=("parallel", "parallel"),
                vmem_limit_bytes=vmem_limit(C * hw_tile * itemsize, 4)),
        )(x, scale)

    return out.reshape(N, C, H, W)


# ---------------------------------------------------------------------------
# Pure-JAX reference (full dilated 3x3 convolutions — exact PyTorch math).
# ---------------------------------------------------------------------------
def ca_layer_ref(x, params):
    y = jnp.mean(x, axis=(2, 3), keepdims=True)              # (N, C, 1, 1)

    def conv(inp, w, b, pad, dil):
        out = jax.lax.conv_general_dilated(
            inp, w, window_strides=(1, 1),
            padding=[(pad, pad), (pad, pad)], rhs_dilation=(dil, dil),
            dimension_numbers=("NCHW", "OIHW", "NCHW"))
        return out + b[None, :, None, None]

    c1 = jax.nn.relu(conv(y, params["w1"], params["b1"], 3, 3))
    c2 = jax.nn.relu(conv(y, params["w2"], params["b2"], 5, 5))
    c3 = jax.nn.relu(conv(y, params["w3"], params["b3"], 7, 7))
    cat = jnp.concatenate([c1, c2, c3], axis=1)
    y4 = jax.nn.sigmoid(conv(cat, params["w4"], params["b4"], 1, 1))
    return x * y4


def make_params(key, channel, reduction):
    cr = channel // reduction
    keys = jax.random.split(key, 8)
    scale = 0.1
    return {
        "w1": scale * jax.random.normal(keys[0], (cr, channel, 3, 3), jnp.float32),
        "b1": scale * jax.random.normal(keys[1], (cr,), jnp.float32),
        "w2": scale * jax.random.normal(keys[2], (cr, channel, 3, 3), jnp.float32),
        "b2": scale * jax.random.normal(keys[3], (cr,), jnp.float32),
        "w3": scale * jax.random.normal(keys[4], (cr, channel, 3, 3), jnp.float32),
        "b3": scale * jax.random.normal(keys[5], (cr,), jnp.float32),
        "w4": scale * jax.random.normal(keys[6], (channel, 3 * cr, 3, 3), jnp.float32),
        "b4": scale * jax.random.normal(keys[7], (channel,), jnp.float32),
    }


if __name__ == "__main__":
    reduction = 16
    N, C, H, W = 2, 64, 16, 16     # HW = 256 -> lane-dense blocks

    key = jax.random.PRNGKey(0)
    kx, kp = jax.random.split(key)
    x = jax.random.normal(kx, (N, C, H, W), jnp.float32)
    params = make_params(kp, C, reduction)

    # 1) Main fused path.
    out = jax.block_until_ready(ca_layer_pallas(x, params))
    ref = jax.block_until_ready(ca_layer_ref(x, params))
    assert out.shape == (N, C, H, W)
    assert jnp.allclose(out, ref, atol=1e-5, rtol=1e-5), "fused path mismatch"

    # 2) Awkward batch size (exercises cdiv grid / Nb selection).
    x3 = jax.random.normal(jax.random.PRNGKey(1), (3, C, H, W), jnp.float32)
    out3 = jax.block_until_ready(ca_layer_pallas(x3, params))
    ref3 = jax.block_until_ready(ca_layer_ref(x3, params))
    assert jnp.allclose(out3, ref3, atol=1e-5, rtol=1e-5), "odd-batch mismatch"

    # 3) Force the two-pass large-feature-map fallback with a tiny budget.
    out_fb = jax.block_until_ready(
        ca_layer_pallas(x, params, block_budget_bytes=32 << 10))
    assert jnp.allclose(out_fb, ref, atol=1e-5, rtol=1e-5), "fallback mismatch"

    print("KERNEL_OK")
</pallas_src>

<mosaic_0001>
module attributes {stable_mosaic.version = 11 : i64} {
  func.func @kernel(%arg0: i32, %arg1: memref<2x64x256xf32, #tpu.memory_space<vmem>>, %arg2: memref<64x12xf32, #tpu.memory_space<vmem>>, %arg3: memref<1x12xf32, #tpu.memory_space<vmem>>, %arg4: memref<12x64xf32, #tpu.memory_space<vmem>>, %arg5: memref<1x64xf32, #tpu.memory_space<vmem>>, %arg6: memref<2x64x256xf32, #tpu.memory_space<vmem>>) attributes {dimension_semantics = [#tpu.dimension_semantics<parallel>], iteration_bounds = array<i64: 1>, scalar_prefetch = 0 : i64, scratch_operands = 0 : i64, tpu.core_type = #tpu.core_type<tc>, window_params = [{transform_indices = @transform_0, window_bounds = array<i64: 2, 64, 256>}, {pipeline_mode = #tpu.pipeline_mode<synchronous>, transform_indices = @transform_1, window_bounds = array<i64: 64, 12>}, {pipeline_mode = #tpu.pipeline_mode<synchronous>, transform_indices = @transform_2, window_bounds = array<i64: 1, 12>}, {pipeline_mode = #tpu.pipeline_mode<synchronous>, transform_indices = @transform_3, window_bounds = array<i64: 12, 64>}, {pipeline_mode = #tpu.pipeline_mode<synchronous>, transform_indices = @transform_4, window_bounds = array<i64: 1, 64>}, {transform_indices = @transform_5, window_bounds = array<i64: 2, 64, 256>}]} {
    %c0 = arith.constant 0 : index
    %c0_0 = arith.constant 0 : index
    %c0_1 = arith.constant 0 : index
    %0 = vector.load %arg1[%c0, %c0_0, %c0_1] : memref<2x64x256xf32, #tpu.memory_space<vmem>>, vector<2x64x256xf32>
    %cst = arith.constant dense<0.000000e+00> : vector<2x64xf32>
    %1 = vector.multi_reduction <add>, %0, %cst [2] : vector<2x64x256xf32> to vector<2x64xf32>
    %cst_2 = arith.constant 3.906250e-03 : f32
    %2 = vector.broadcast %cst_2 : f32 to vector<2x64xf32>
    %3 = arith.mulf %1, %2 : vector<2x64xf32>
    %c0_3 = arith.constant 0 : index
    %c0_4 = arith.constant 0 : index
    %4 = vector.load %arg2[%c0_3, %c0_4] : memref<64x12xf32, #tpu.memory_space<vmem>>, vector<64x12xf32>
    %cst_5 = arith.constant dense<0.000000e+00> : vector<2x12xf32>
    %5 = tpu.matmul %3, %4, %cst_5 {dimension_numbers = #tpu.dot_dimension_numbers<[1], [0], [0], [1], [0, 0, 1, 1], [], []>} : vector<2x64xf32>, vector<64x12xf32>, vector<2x12xf32> -> vector<2x12xf32>
    %c0_6 = arith.constant 0 : index
    %c0_7 = arith.constant 0 : index
    %6 = vector.load %arg3[%c0_6, %c0_7] : memref<1x12xf32, #tpu.memory_space<vmem>>, vector<1x12xf32>
    %7 = vector.broadcast %6 : vector<1x12xf32> to vector<2x12xf32>
    %8 = arith.addf %5, %7 : vector<2x12xf32>
    %cst_8 = arith.constant 0.000000e+00 : f32
    %9 = vector.broadcast %cst_8 : f32 to vector<2x12xf32>
    %10 = arith.maximumf %8, %9 : vector<2x12xf32>
    %c0_9 = arith.constant 0 : index
    %c0_10 = arith.constant 0 : index
    %11 = vector.load %arg4[%c0_9, %c0_10] : memref<12x64xf32, #tpu.memory_space<vmem>>, vector<12x64xf32>
    %cst_11 = arith.constant dense<0.000000e+00> : vector<2x64xf32>
    %12 = tpu.matmul %10, %11, %cst_11 {dimension_numbers = #tpu.dot_dimension_numbers<[1], [0], [0], [1], [0, 0, 1, 1], [], []>} : vector<2x12xf32>, vector<12x64xf32>, vector<2x64xf32> -> vector<2x64xf32>
    %c0_12 = arith.constant 0 : index
    %c0_13 = arith.constant 0 : index
    %13 = vector.load %arg5[%c0_12, %c0_13] : memref<1x64xf32, #tpu.memory_space<vmem>>, vector<1x64xf32>
    %14 = vector.broadcast %13 : vector<1x64xf32> to vector<2x64xf32>
    %15 = arith.addf %12, %14 : vector<2x64xf32>
    %16 = arith.negf %15 : vector<2x64xf32>
    %17 = math.exp %16 : vector<2x64xf32>
    %cst_14 = arith.constant 1.000000e+00 : f32
    %18 = vector.broadcast %cst_14 : f32 to vector<2x64xf32>
    %19 = arith.addf %18, %17 : vector<2x64xf32>
    %20 = arith.divf %18, %19 : vector<2x64xf32>
    %c0_15 = arith.constant 0 : index
    %c0_16 = arith.constant 0 : index
    %c0_17 = arith.constant 0 : index
    %21 = vector.load %arg1[%c0_15, %c0_16, %c0_17] : memref<2x64x256xf32, #tpu.memory_space<vmem>>, vector<2x64x256xf32>
    %22 = vector.shape_cast %20 : vector<2x64xf32> to vector<2x64x1xf32>
    %23 = vector.broadcast %22 : vector<2x64x1xf32> to vector<2x64x256xf32>
    %24 = arith.mulf %21, %23 : vector<2x64x256xf32>
    %c0_18 = arith.constant 0 : index
    %c0_19 = arith.constant 0 : index
    %c0_20 = arith.constant 0 : index
    %25 = vector.load %arg6[%c0_18, %c0_19, %c0_20] : memref<2x64x256xf32, #tpu.memory_space<vmem>>, vector<2x64x256xf32>
    tpu.vector_store %arg6[%c0_18, %c0_19, %c0_20], %24 {strides = array<i32>} : memref<2x64x256xf32, #tpu.memory_space<vmem>>, vector<2x64x256xf32>,
    return
  }
  func.func @transform_0(%arg0: i32) -> (i32, i32, i32) {
    %c0_i32 = arith.constant 0 : i32
    %c0_i32_0 = arith.constant 0 : i32
    %c0_i32_1 = arith.constant 0 : i32
    return %arg0, %c0_i32, %c0_i32_0 : i32, i32, i32
  }
  func.func @transform_1(%arg0: i32) -> (i32, i32) {
    %c0_i32 = arith.constant 0 : i32
    %c0_i32_0 = arith.constant 0 : i32
    %c0_i32_1 = arith.constant 0 : i32
    return %c0_i32, %c0_i32_0 : i32, i32
  }
  func.func @transform_2(%arg0: i32) -> (i32, i32) {
    %c0_i32 = arith.constant 0 : i32
    %c0_i32_0 = arith.constant 0 : i32
    %c0_i32_1 = arith.constant 0 : i32
    return %c0_i32, %c0_i32_0 : i32, i32
  }
  func.func @transform_3(%arg0: i32) -> (i32, i32) {
    %c0_i32 = arith.constant 0 : i32
    %c0_i32_0 = arith.constant 0 : i32
    %c0_i32_1 = arith.constant 0 : i32
    return %c0_i32, %c0_i32_0 : i32, i32
  }
  func.func @transform_4(%arg0: i32) -> (i32, i32) {
    %c0_i32 = arith.constant 0 : i32
    %c0_i32_0 = arith.constant 0 : i32
    %c0_i32_1 = arith.constant 0 : i32
    return %c0_i32, %c0_i32_0 : i32, i32
  }
  func.func @transform_5(%arg0: i32) -> (i32, i32, i32) {
    %c0_i32 = arith.constant 0 : i32
    %c0_i32_0 = arith.constant 0 : i32
    %c0_i32_1 = arith.constant 0 : i32
    return %arg0, %c0_i32, %c0_i32_0 : i32, i32, i32
  }
}

module attributes {stable_mosaic.version = 11 : i64} {
  func.func @kernel(%arg0: i32, %arg1: memref<2x64x256xf32, #tpu.memory_space<vmem>>, %arg2: memref<64x12xf32, #tpu.memory_space<vmem>>, %arg3: memref<1x12xf32, #tpu.memory_space<vmem>>, %arg4: memref<12x64xf32, #tpu.memory_space<vmem>>, %arg5: memref<1x64xf32, #tpu.memory_space<vmem>>, %arg6: memref<2x64x256xf32, #tpu.memory_space<vmem>>) attributes {dimension_semantics = [#tpu.dimension_semantics<parallel>], iteration_bounds = array<i64: 1>, scalar_prefetch = 0 : i64, scratch_operands = 0 : i64, tpu.core_type = #tpu.core_type<tc>, window_params = [{transform_indices = @transform_0, window_bounds = array<i64: 2, 64, 256>}, {pipeline_mode = #tpu.pipeline_mode<synchronous>, transform_indices = @transform_1, window_bounds = array<i64: 64, 12>}, {pipeline_mode = #tpu.pipeline_mode<synchronous>, transform_indices = @transform_2, window_bounds = array<i64: 1, 12>}, {pipeline_mode = #tpu.pipeline_mode<synchronous>, transform_indices = @transform_3, window_bounds = array<i64: 12, 64>}, {pipeline_mode = #tpu.pipeline_mode<synchronous>, transform_indices = @transform_4, window_bounds = array<i64: 1, 64>}, {transform_indices = @transform_5, window_bounds = array<i64: 2, 64, 256>}]} {
    %c0 = arith.constant 0 : index
    %c0_0 = arith.constant 0 : index
    %c0_1 = arith.constant 0 : index
    %0 = vector.load %arg1[%c0, %c0_0, %c0_1] : memref<2x64x256xf32, #tpu.memory_space<vmem>>, vector<2x64x256xf32>
    %cst = arith.constant dense<0.000000e+00> : vector<2x64xf32>
    %1 = vector.multi_reduction <add>, %0, %cst [2] : vector<2x64x256xf32> to vector<2x64xf32>
    %cst_2 = arith.constant 3.906250e-03 : f32
    %2 = vector.broadcast %cst_2 : f32 to vector<2x64xf32>
    %3 = arith.mulf %1, %2 : vector<2x64xf32>
    %c0_3 = arith.constant 0 : index
    %c0_4 = arith.constant 0 : index
    %4 = vector.load %arg2[%c0_3, %c0_4] : memref<64x12xf32, #tpu.memory_space<vmem>>, vector<64x12xf32>
    %cst_5 = arith.constant dense<0.000000e+00> : vector<2x12xf32>
    %5 = tpu.matmul %3, %4, %cst_5 {dimension_numbers = #tpu.dot_dimension_numbers<[1], [0], [0], [1], [0, 0, 1, 1], [], []>} : vector<2x64xf32>, vector<64x12xf32>, vector<2x12xf32> -> vector<2x12xf32>
    %c0_6 = arith.constant 0 : index
    %c0_7 = arith.constant 0 : index
    %6 = vector.load %arg3[%c0_6, %c0_7] : memref<1x12xf32, #tpu.memory_space<vmem>>, vector<1x12xf32>
    %7 = vector.broadcast %6 : vector<1x12xf32> to vector<2x12xf32>
    %8 = arith.addf %5, %7 : vector<2x12xf32>
    %cst_8 = arith.constant 0.000000e+00 : f32
    %9 = vector.broadcast %cst_8 : f32 to vector<2x12xf32>
    %10 = arith.maximumf %8, %9 : vector<2x12xf32>
    %c0_9 = arith.constant 0 : index
    %c0_10 = arith.constant 0 : index
    %11 = vector.load %arg4[%c0_9, %c0_10] : memref<12x64xf32, #tpu.memory_space<vmem>>, vector<12x64xf32>
    %cst_11 = arith.constant dense<0.000000e+00> : vector<2x64xf32>
    %12 = tpu.matmul %10, %11, %cst_11 {dimension_numbers = #tpu.dot_dimension_numbers<[1], [0], [0], [1], [0, 0, 1, 1], [], []>} : vector<2x12xf32>, vector<12x64xf32>, vector<2x64xf32> -> vector<2x64xf32>
    %c0_12 = arith.constant 0 : index
    %c0_13 = arith.constant 0 : index
    %13 = vector.load %arg5[%c0_12, %c0_13] : memref<1x64xf32, #tpu.memory_space<vmem>>, vector<1x64xf32>
    %14 = vector.broadcast %13 : vector<1x64xf32> to vector<2x64xf32>
    %15 = arith.addf %12, %14 : vector<2x64xf32>
    %16 = arith.negf %15 : vector<2x64xf32>
    %17 = math.exp %16 : vector<2x64xf32>
    %cst_14 = arith.constant 1.000000e+00 : f32
    %18 = vector.broadcast %cst_14 : f32 to vector<2x64xf32>
    %19 = arith.addf %18, %17 : vector<2x64xf32>
    %20 = arith.divf %18, %19 : vector<2x64xf32>
    %c0_15 = arith.constant 0 : index
    %c0_16 = arith.constant 0 : index
    %c0_17 = arith.constant 0 : index
    %21 = vector.load %arg1[%c0_15, %c0_16, %c0_17] : memref<2x64x256xf32, #tpu.memory_space<vmem>>, vector<2x64x256xf32>
    %22 = vector.shape_cast %20 : vector<2x64xf32> to vector<2x64x1xf32>
    %23 = vector.broadcast %22 : vector<2x64x1xf32> to vector<2x64x256xf32>
    %24 = arith.mulf %21, %23 : vector<2x64x256xf32>
    %c0_18 = arith.constant 0 : index
    %c0_19 = arith.constant 0 : index
    %c0_20 = arith.constant 0 : index
    %25 = vector.load %arg6[%c0_18, %c0_19, %c0_20] : memref<2x64x256xf32, #tpu.memory_space<vmem>>, vector<2x64x256xf32>
    tpu.vector_store %arg6[%c0_18, %c0_19, %c0_20], %24 {strides = array<i32>} : memref<2x64x256xf32, #tpu.memory_space<vmem>>, vector<2x64x256xf32>,
    return
  }
  func.func @transform_0(%arg0: i32) -> (i32, i32, i32) {
    %c0_i32 = arith.constant 0 : i32
    %c0_i32_0 = arith.constant 0 : i32
    %c0_i32_1 = arith.constant 0 : i32
    return %arg0, %c0_i32, %c0_i32_0 : i32, i32, i32
  }
  func.func @transform_1(%arg0: i32) -> (i32, i32) {
    %c0_i32 = arith.constant 0 : i32
    %c0_i32_0 = arith.constant 0 : i32
    %c0_i32_1 = arith.constant 0 : i32
    return %c0_i32, %c0_i32_0 : i32, i32
  }
  func.func @transform_2(%arg0: i32) -> (i32, i32) {
    %c0_i32 = arith.constant 0 : i32
    %c0_i32_0 = arith.constant 0 : i32
    %c0_i32_1 = arith.constant 0 : i32
    return %c0_i32, %c0_i32_0 : i32, i32
  }
  func.func @transform_3(%arg0: i32) -> (i32, i32) {
    %c0_i32 = arith.constant 0 : i32
    %c0_i32_0 = arith.constant 0 : i32
    %c0_i32_1 = arith.constant 0 : i32
    return %c0_i32, %c0_i32_0 : i32, i32
  }
  func.func @transform_4(%arg0: i32) -> (i32, i32) {
    %c0_i32 = arith.constant 0 : i32
    %c0_i32_0 = arith.constant 0 : i32
    %c0_i32_1 = arith.constant 0 : i32
    return %c0_i32, %c0_i32_0 : i32, i32
  }
  func.func @transform_5(%arg0: i32) -> (i32, i32, i32) {
    %c0_i32 = arith.constant 0 : i32
    %c0_i32_0 = arith.constant 0 : i32
    %c0_i32_1 = arith.constant 0 : i32
    return %arg0, %c0_i32, %c0_i32_0 : i32, i32, i32
  }
}

</mosaic_0001>

<llo_original>
// kernel: tpu_custom_call.1
$region0: #{tpu_custom_call.1}
  #allocation0 [shape = 'u32[]', space=smem, size = 0x4, offset = 0x4, fixed_abs, tag = 'smem constant byte address 0x4 - core index']
  #allocation1 [shape = 'u32[144,128]{1,0:T(1,128)}', space=vmem, size = 0x12000, scoped, tag = 'internal scratch']
  %s0 = inlined_call_operand.hbm [shape: f32[2,64,256], index: 0, kind: input, shape index: {}]
  %s1 = inlined_call_operand.vmem [shape: f32[64,12], index: 1, kind: input, shape index: {}]
  %s2 = inlined_call_operand.vmem [shape: f32[1,12], index: 2, kind: input, shape index: {}]
  %s3 = inlined_call_operand.vmem [shape: f32[12,64], index: 3, kind: input, shape index: {}]
  %s4 = inlined_call_operand.vmem [shape: f32[1,64], index: 4, kind: input, shape index: {}]
  %s5 = inlined_call_operand.hbm [shape: f32[2,64,256], index: 5, kind: output, shape index: {}]
  %s6 = sld [smem:[#allocation0]]
  $region34: #{tpu_custom_call.1} parent=0
    _
  %s8 = ssub.s32 1, %s6
  %s9 = scalar_select 0, %s8, %s6
  $region1: #{tpu_custom_call.1} parent=0
    #allocation2 [shape = 'u8[131072]{0}', space=vmem, size = 0x20000, scoped, tag = 'input window, operand 0, single buffered']
    #allocation3 [shape = 's32[1]{0}', space=sflag, size = 0x4, scoped, tag = 'scoped memory for tpu_custom_call.1']
    #allocation4 [shape = 's32[1]{0}', space=sflag, size = 0x4, scoped, tag = 'scoped memory for tpu_custom_call.1']
    #allocation5 [shape = 'u8[131072]{0}', space=vmem, size = 0x20000, scoped, tag = 'output window, operand 0, single buffered']
    %10 = vsyncpa [#allocation3], 0
    %11 = vsyncpa [#allocation4], 0
    // Predicated region
    $region2: #{tpu_custom_call.1} parent=1 // pred_check
      _
    $region3: #{tpu_custom_call.1} parent=1 // pred_check_branch
      %13 = sbr.rel (0) target = $region5
    $region4: #{tpu_custom_call.1} parent=1 // pred_region
      %s15 = ssub.s32 4096, 4096
      %16 = vsyncadd [#allocation3], %s15
      %s17 = sshll.u32 [#allocation2], 4
      %s18 = int_to_ptr.vmem [resolvable:$true] %s17
      %23 = dma.hbm_to_vmem [thread:$0]  %s0, 4096, %s18, [#allocation3], 256, 256, 16
    $region5: #{tpu_custom_call.1} parent=1 // pred_fallthru
      _
    // Predicated region
    $region6: #{tpu_custom_call.1} parent=1 // pred_check
      _
    $region7: #{tpu_custom_call.1} parent=1 // pred_check_branch
      %25 = sbr.rel (0) target = $region9
    $region8: #{tpu_custom_call.1} parent=1 // pred_region
      _
    $region9: #{tpu_custom_call.1} parent=1 // pred_fallthru
      _
    // Predicated region
    $region10: #{tpu_custom_call.1} parent=1 // pred_check
      _
    $region11: #{tpu_custom_call.1} parent=1 // pred_check_branch
      %27 = sbr.rel (0) target = $region13
    $region12: #{tpu_custom_call.1} parent=1 // pred_region
      _
    $region13: #{tpu_custom_call.1} parent=1 // pred_fallthru
      _
    // Predicated region
    $region14: #{tpu_custom_call.1} parent=1 // pred_check
      _
    $region15: #{tpu_custom_call.1} parent=1 // pred_check_branch
      %29 = sbr.rel (0) target = $region17
    $region16: #{tpu_custom_call.1} parent=1 // pred_region
      _
    $region17: #{tpu_custom_call.1} parent=1 // pred_fallthru
      _
    // Predicated region
    $region18: #{tpu_custom_call.1} parent=1 // pred_check
      _
    $region19: #{tpu_custom_call.1} parent=1 // pred_check_branch
      %31 = sbr.rel (0) target = $region21
    $region20: #{tpu_custom_call.1} parent=1 // pred_region
      _
    $region21: #{tpu_custom_call.1} parent=1 // pred_fallthru
      _
    // Predicated region
    $region22: #{tpu_custom_call.1} parent=1 // pred_check
      _
    $region23: #{tpu_custom_call.1} parent=1 // pred_check_branch
      %33 = sbr.rel (0) target = $region25
    $region24: #{tpu_custom_call.1} parent=1 // pred_region
      %34 = dma.done [#allocation3], 4096
    $region25: #{tpu_custom_call.1} parent=1 // pred_fallthru
      _
    %v35 = vld [vmem:[#allocation2] sm:$0xff]
    %v36 = vld [vmem:[#allocation2 + $0x8] sm:$0xff]
    %v37 = vld [vmem:[#allocation2 + $0x10] sm:$0xff]
    %v38 = vld [vmem:[#allocation2 + $0x18] sm:$0xff]
    %v39 = vld [vmem:[#allocation2 + $0x20] sm:$0xff]
    %v40 = vld [vmem:[#allocation2 + $0x28] sm:$0xff]
    %v41 = vld [vmem:[#allocation2 + $0x30] sm:$0xff]
    %v42 = vld [vmem:[#allocation2 + $0x38] sm:$0xff]
    %v43 = vld [vmem:[#allocation2 + $0x40] sm:$0xff]
    %v44 = vld [vmem:[#allocation2 + $0x48] sm:$0xff]
    %v45 = vld [vmem:[#allocation2 + $0x50] sm:$0xff]
    %v46 = vld [vmem:[#allocation2 + $0x58] sm:$0xff]
    %v47 = vld [vmem:[#allocation2 + $0x60] sm:$0xff]
    %v48 = vld [vmem:[#allocation2 + $0x68] sm:$0xff]
    %v49 = vld [vmem:[#allocation2 + $0x70] sm:$0xff]
    %v50 = vld [vmem:[#allocation2 + $0x78] sm:$0xff]
    %v51 = vld [vmem:[#allocation2 + $0x80] sm:$0xff]
    %v52 = vld [vmem:[#allocation2 + $0x88] sm:$0xff]
    %v53 = vld [vmem:[#allocation2 + $0x90] sm:$0xff]
    %v54 = vld [vmem:[#allocation2 + $0x98] sm:$0xff]
    %v55 = vld [vmem:[#allocation2 + $0xa0] sm:$0xff]
    %v56 = vld [vmem:[#allocation2 + $0xa8] sm:$0xff]
    %v57 = vld [vmem:[#allocation2 + $0xb0] sm:$0xff]
    %v58 = vld [vmem:[#allocation2 + $0xb8] sm:$0xff]
    %v59 = vld [vmem:[#allocation2 + $0xc0] sm:$0xff]
    %v60 = vld [vmem:[#allocation2 + $0xc8] sm:$0xff]
    %v61 = vld [vmem:[#allocation2 + $0xd0] sm:$0xff]
    %v62 = vld [vmem:[#allocation2 + $0xd8] sm:$0xff]
    %v63 = vld [vmem:[#allocation2 + $0xe0] sm:$0xff]
    %v64 = vld [vmem:[#allocation2 + $0xe8] sm:$0xff]
    %v65 = vld [vmem:[#allocation2 + $0xf0] sm:$0xff]
    %v66 = vld [vmem:[#allocation2 + $0xf8] sm:$0xff]
    %v67 = vadd.f32 %v35, %v36
    %68 = vadd.xlane.f32.xlu0 %v67
    %v69 = vpop.xlane.xlu0 %68
    %v70 = vadd.f32 %v37, %v38
    %71 = vadd.xlane.f32.xlu0 %v70
    %v72 = vpop.xlane.xlu0 %71
    %v73 = vadd.f32 %v39, %v40
    %74 = vadd.xlane.f32.xlu0 %v73
    %v75 = vpop.xlane.xlu0 %74
    %v76 = vadd.f32 %v41, %v42
    %77 = vadd.xlane.f32.xlu0 %v76
    %v78 = vpop.xlane.xlu0 %77
    %v79 = vadd.f32 %v43, %v44
    %80 = vadd.xlane.f32.xlu0 %v79
    %v81 = vpop.xlane.xlu0 %80
    %v82 = vadd.f32 %v45, %v46
    %83 = vadd.xlane.f32.xlu0 %v82
    %v84 = vpop.xlane.xlu0 %83
    %v85 = vadd.f32 %v47, %v48
    %86 = vadd.xlane.f32.xlu0 %v85
    %v87 = vpop.xlane.xlu0 %86
    %v88 = vadd.f32 %v49, %v50
    %89 = vadd.xlane.f32.xlu0 %v88
    %v90 = vpop.xlane.xlu0 %89
    %v91 = vadd.f32 %v51, %v52
    %92 = vadd.xlane.f32.xlu0 %v91
    %v93 = vpop.xlane.xlu0 %92
    %v94 = vadd.f32 %v53, %v54
    %95 = vadd.xlane.f32.xlu0 %v94
    %v96 = vpop.xlane.xlu0 %95
    %v97 = vadd.f32 %v55, %v56
    %98 = vadd.xlane.f32.xlu0 %v97
    %v99 = vpop.xlane.xlu0 %98
    %v100 = vadd.f32 %v57, %v58
    %101 = vadd.xlane.f32.xlu0 %v100
    %v102 = vpop.xlane.xlu0 %101
    %v103 = vadd.f32 %v59, %v60
    %104 = vadd.xlane.f32.xlu0 %v103
    %v105 = vpop.xlane.xlu0 %104
    %v106 = vadd.f32 %v61, %v62
    %107 = vadd.xlane.f32.xlu0 %v106
    %v108 = vpop.xlane.xlu0 %107
    %v109 = vadd.f32 %v63, %v64
    %110 = vadd.xlane.f32.xlu0 %v109
    %v111 = vpop.xlane.xlu0 %110
    %v112 = vadd.f32 %v65, %v66
    %113 = vadd.xlane.f32.xlu0 %v112
    %v114 = vpop.xlane.xlu0 %113
    %v115 = vmul.f32 %v69, 0.00390625
    %v116 = vmul.f32 %v72, 0.00390625
    %v117 = vmul.f32 %v75, 0.00390625
    %v118 = vmul.f32 %v78, 0.00390625
    %v119 = vmul.f32 %v81, 0.00390625
    %v120 = vmul.f32 %v84, 0.00390625
    %v121 = vmul.f32 %v87, 0.00390625
    %v122 = vmul.f32 %v90, 0.00390625
    %v123 = vmul.f32 %v93, 0.00390625
    %v124 = vmul.f32 %v96, 0.00390625
    %v125 = vmul.f32 %v99, 0.00390625
    %v126 = vmul.f32 %v102, 0.00390625
    %v127 = vmul.f32 %v105, 0.00390625
    %v128 = vmul.f32 %v108, 0.00390625
    %v129 = vmul.f32 %v111, 0.00390625
    %v130 = vmul.f32 %v114, 0.00390625
    %v131 = vld [vmem:[%s1] sm:$0xff]
    %v132 = vld [vmem:[%s1 + $0x8] sm:$0xff]
    %v133 = vld [vmem:[%s1 + $0x10] sm:$0xff]
    %v134 = vld [vmem:[%s1 + $0x18] sm:$0xff]
    %v135 = vld [vmem:[%s1 + $0x20] sm:$0xff]
    %v136 = vld [vmem:[%s1 + $0x28] sm:$0xff]
    %v137 = vld [vmem:[%s1 + $0x30] sm:$0xff]
    %v138 = vld [vmem:[%s1 + $0x38] sm:$0xff]
    %v139 = vld [vmem:[%s2] sm:$0x1]
    %v141 = vlaneseq
    %v142 = vshrl.u32 %v141, 7
    %v143 = vsub.s32 0, %v142
    %v144 = vrot.slane %v139, %v143
    %v162 = vlaneseq
    %v163 = vand.u32 %v162, 127
    %v164 = vlaneseq
    %v165 = vshrl.u32 %v164, 7
    %v166 = vsub.s32 %v163, %v165
    %v167 = vrot.slane %v115, %v166
    %v168 = vadd.s32 %v163, 4294967288
    %v169 = vlaneseq
    %v170 = vshrl.u32 %v169, 7
    %v171 = vsub.s32 %v168, %v170
    %v172 = vrot.slane %v116, %v171
    %vm173 = vcmask 130112
    %v174 = vsel %vm173, %v172, %v167
    %v175 = vadd.s32 %v163, 4294967280
    %v176 = vlaneseq
    %v177 = vshrl.u32 %v176, 7
    %v178 = vsub.s32 %v175, %v177
    %v179 = vrot.slane %v117, %v178
    %vm180 = vcmask 195712
    %v181 = vsel %vm180, %v179, %v174
    %v182 = vadd.s32 %v163, 4294967272
    %v183 = vlaneseq
    %v184 = vshrl.u32 %v183, 7
    %v185 = vsub.s32 %v182, %v184
    %v186 = vrot.slane %v118, %v185
    %vm187 = vcmask 261312
    %v188 = vsel %vm187, %v186, %v181
    %v189 = vadd.s32 %v163, 4294967264
    %v190 = vlaneseq
    %v191 = vshrl.u32 %v190, 7
    %v192 = vsub.s32 %v189, %v191
    %v193 = vrot.slane %v119, %v192
    %vm194 = vcmask 326912
    %v195 = vsel %vm194, %v193, %v188
    %v196 = vadd.s32 %v163, 4294967256
    %v197 = vlaneseq
    %v198 = vshrl.u32 %v197, 7
    %v199 = vsub.s32 %v196, %v198
    %v200 = vrot.slane %v120, %v199
    %vm201 = vcmask 392512
    %v202 = vsel %vm201, %v200, %v195
    %v203 = vadd.s32 %v163, 4294967248
    %v204 = vlaneseq
    %v205 = vshrl.u32 %v204, 7
    %v206 = vsub.s32 %v203, %v205
    %v207 = vrot.slane %v121, %v206
    %vm208 = vcmask 458112
    %v209 = vsel %vm208, %v207, %v202
    %v210 = vadd.s32 %v163, 4294967240
    %v211 = vlaneseq
    %v212 = vshrl.u32 %v211, 7
    %v213 = vsub.s32 %v210, %v212
    %v214 = vrot.slane %v122, %v213
    %vm215 = vcmask 523712
    %v216 = vsel %vm215, %v214, %v209
    %v217 = vlaneseq
    %v218 = vshrl.u32 %v217, 7
    %v219 = vsub.s32 %v163, %v218
    %v220 = vrot.slane %v123, %v219
    %v221 = vlaneseq
    %v222 = vshrl.u32 %v221, 7
    %v223 = vsub.s32 %v168, %v222
    %v224 = vrot.slane %v124, %v223
    %v225 = vsel %vm173, %v224, %v220
    %v226 = vlaneseq
    %v227 = vshrl.u32 %v226, 7
    %v228 = vsub.s32 %v175, %v227
    %v229 = vrot.slane %v125, %v228
    %v230 = vsel %vm180, %v229, %v225
    %v231 = vlaneseq
    %v232 = vshrl.u32 %v231, 7
    %v233 = vsub.s32 %v182, %v232
    %v234 = vrot.slane %v126, %v233
    %v235 = vsel %vm187, %v234, %v230
    %v236 = vlaneseq
    %v237 = vshrl.u32 %v236, 7
    %v238 = vsub.s32 %v189, %v237
    %v239 = vrot.slane %v127, %v238
    %v240 = vsel %vm194, %v239, %v235
    %v241 = vlaneseq
    %v242 = vshrl.u32 %v241, 7
    %v243 = vsub.s32 %v196, %v242
    %v244 = vrot.slane %v128, %v243
    %v245 = vsel %vm201, %v244, %v240
    %v246 = vlaneseq
    %v247 = vshrl.u32 %v246, 7
    %v248 = vsub.s32 %v203, %v247
    %v249 = vrot.slane %v129, %v248
    %v250 = vsel %vm208, %v249, %v245
    %v251 = vlaneseq
    %v252 = vshrl.u32 %v251, 7
    %v253 = vsub.s32 %v210, %v252
    %v254 = vrot.slane %v130, %v253
    %v255 = vsel %vm215, %v254, %v250
    %vm256 = vcmask 1041409
    %v257 = vsel %vm256, %v255, %v216
    %vm258 = vcmask 523264
    %v259 = vsel %vm258, %v257, 0
    %261 = vmatprep.subr.mxu0 0.0
    %262 = vmatpush1.msra.mxu0 %v131
    %263 = vmatprep.subr.mxu0 0.0
    %264 = vmatpush1.msra.mxu0 %v132
    %265 = vmatprep.subr.mxu0 0.0
    %266 = vmatpush1.msra.mxu0 %v133
    %267 = vmatprep.subr.mxu0 0.0
    %268 = vmatpush1.msra.mxu0 %v134
    %269 = vmatprep.subr.mxu0 0.0
    %270 = vmatpush1.msra.mxu0 %v135
    %271 = vmatprep.subr.mxu0 0.0
    %272 = vmatpush1.msra.mxu0 %v136
    %273 = vmatprep.subr.mxu0 0.0
    %274 = vmatpush1.msra.mxu0 %v137
    %275 = vmatprep.subr.mxu0 0.0
    %276 = vmatpush1.msra.mxu0 %v138
    %277 = vmatprep.subr.mxu0 0.0
    %278 = vmatpush1.msra.mxu0 0.0
    %279 = vmatprep.subr.mxu0 0.0
    %280 = vmatpush1.msra.mxu0 0.0
    %281 = vmatprep.subr.mxu0 0.0
    %282 = vmatpush1.msra.mxu0 0.0
    %283 = vmatprep.subr.mxu0 0.0
    %284 = vmatpush1.msra.mxu0 0.0
    %285 = vmatprep.subr.mxu0 0.0
    %286 = vmatpush1.msra.mxu0 0.0
    %287 = vmatprep.subr.mxu0 0.0
    %288 = vmatpush1.msra.mxu0 0.0
    %289 = vmatprep.subr.mxu0 0.0
    %290 = vmatpush1.msra.mxu0 0.0
    %291 = vmatprep.subr.mxu0 0.0
    %292 = vmatpush1.msra.mxu0 0.0
    %293 = vmatprep.subr.mxu0 0.0
    %294 = vmatpush1.msra.mxu0 0.0
    %295 = vmatprep.subr.mxu0 0.0
    %296 = vmatpush1.msra.mxu0 0.0
    %297 = vmatprep.subr.mxu0 0.0
    %298 = vmatpush1.msra.mxu0 0.0
    %299 = vmatprep.subr.mxu0 0.0
    %300 = vmatpush1.msra.mxu0 0.0
    %301 = vmatprep.subr.mxu0 0.0
    %302 = vmatpush1.msra.mxu0 0.0
    %303 = vmatprep.subr.mxu0 0.0
    %304 = vmatpush1.msra.mxu0 0.0
    %305 = vmatprep.subr.mxu0 0.0
    %306 = vmatpush1.msra.mxu0 0.0
    %307 = vmatprep.subr.mxu0 0.0
    %308 = vmatpush1.msra.mxu0 0.0
    %309 = vmatprep.subr.mxu0 0.0
    %310 = vmatpush1.msra.mxu0 0.0
    %311 = vmatprep.subr.mxu0 0.0
    %312 = vmatpush1.msra.mxu0 0.0
    %313 = vmatprep.subr.mxu0 0.0
    %314 = vmatpush1.msra.mxu0 0.0
    %315 = vmatprep.subr.mxu0 0.0
    %316 = vmatpush1.msra.mxu0 0.0
    %317 = vmatprep.subr.mxu0 0.0
    %318 = vmatpush1.msra.mxu0 0.0
    %319 = vmatprep.subr.mxu0 0.0
    %320 = vmatpush1.msra.mxu0 0.0
    %321 = vmatprep.subr.mxu0 0.0
    %322 = vmatpush1.msra.mxu0 0.0
    %323 = vmatprep.subr.mxu0 0.0
    %324 = vmatpush1.msra.mxu0 0.0
    %325 = vmatprep.mubr.f32.mxu0 0.0
    %326 = vmatmul.mubr.f32.gmra.mrb[0].mxu0 %v259
    %v327 = vpop.f32.mrb[0].mxu0
    %v328 = vadd.f32 %v144, %v327
    %v329 = vpop.f32.mrb[0].mxu0
    %330 = vdwg.mxu0
    %v331 = vmax.f32 %v328, 0.0
    %v332 = vld [vmem:[%s3] sm:$0xff]
    %v333 = vld [vmem:[%s3 + $0x8] sm:$0xf]
    %v334 = vld [vmem:[%s4] sm:$0x1]
    %v336 = vlaneseq
    %v337 = vshrl.u32 %v336, 7
    %v338 = vsub.s32 0, %v337
    %v339 = vrot.slane %v334, %v338
    %vm341 = vcmask 97280
    %v343 = vsel %vm341, %v331, 0
    %vm345 = vcmask 1043456
    %v347 = vsel %vm345, %v333, 0
    %349 = vmatprep.subr.mxu0 0.0
    %350 = vmatpush1.msra.mxu0 %v332
    %351 = vmatprep.subr.mxu0 0.0
    %352 = vmatpush1.msra.mxu0 %v347
    %353 = vmatprep.subr.mxu0 0.0
    %354 = vmatpush1.msra.mxu0 0.0
    %355 = vmatprep.subr.mxu0 0.0
    %356 = vmatpush1.msra.mxu0 0.0
    %357 = vmatprep.subr.mxu0 0.0
    %358 = vmatpush1.msra.mxu0 0.0
    %359 = vmatprep.subr.mxu0 0.0
    %360 = vmatpush1.msra.mxu0 0.0
    %361 = vmatprep.subr.mxu0 0.0
    %362 = vmatpush1.msra.mxu0 0.0
    %363 = vmatprep.subr.mxu0 0.0
    %364 = vmatpush1.msra.mxu0 0.0
    %365 = vmatprep.subr.mxu0 0.0
    %366 = vmatpush1.msra.mxu0 0.0
    %367 = vmatprep.subr.mxu0 0.0
    %368 = vmatpush1.msra.mxu0 0.0
    %369 = vmatprep.subr.mxu0 0.0
    %370 = vmatpush1.msra.mxu0 0.0
    %371 = vmatprep.subr.mxu0 0.0
    %372 = vmatpush1.msra.mxu0 0.0
    %373 = vmatprep.subr.mxu0 0.0
    %374 = vmatpush1.msra.mxu0 0.0
    %375 = vmatprep.subr.mxu0 0.0
    %376 = vmatpush1.msra.mxu0 0.0
    %377 = vmatprep.subr.mxu0 0.0
    %378 = vmatpush1.msra.mxu0 0.0
    %379 = vmatprep.subr.mxu0 0.0
    %380 = vmatpush1.msra.mxu0 0.0
    %381 = vmatprep.subr.mxu0 0.0
    %382 = vmatpush1.msra.mxu0 0.0
    %383 = vmatprep.subr.mxu0 0.0
    %384 = vmatpush1.msra.mxu0 0.0
    %385 = vmatprep.subr.mxu0 0.0
    %386 = vmatpush1.msra.mxu0 0.0
    %387 = vmatprep.subr.mxu0 0.0
    %388 = vmatpush1.msra.mxu0 0.0
    %389 = vmatprep.subr.mxu0 0.0
    %390 = vmatpush1.msra.mxu0 0.0
    %391 = vmatprep.subr.mxu0 0.0
    %392 = vmatpush1.msra.mxu0 0.0
    %393 = vmatprep.subr.mxu0 0.0
    %394 = vmatpush1.msra.mxu0 0.0
    %395 = vmatprep.subr.mxu0 0.0
    %396 = vmatpush1.msra.mxu0 0.0
    %397 = vmatprep.subr.mxu0 0.0
    %398 = vmatpush1.msra.mxu0 0.0
    %399 = vmatprep.subr.mxu0 0.0
    %400 = vmatpush1.msra.mxu0 0.0
    %401 = vmatprep.subr.mxu0 0.0
    %402 = vmatpush1.msra.mxu0 0.0
    %403 = vmatprep.subr.mxu0 0.0
    %404 = vmatpush1.msra.mxu0 0.0
    %405 = vmatprep.subr.mxu0 0.0
    %406 = vmatpush1.msra.mxu0 0.0
    %407 = vmatprep.subr.mxu0 0.0
    %408 = vmatpush1.msra.mxu0 0.0
    %409 = vmatprep.subr.mxu0 0.0
    %410 = vmatpush1.msra.mxu0 0.0
    %411 = vmatprep.subr.mxu0 0.0
    %412 = vmatpush1.msra.mxu0 0.0
    %413 = vmatprep.mubr.f32.mxu0 0.0
    %414 = vmatmul.mubr.f32.gmra.mrb[0].mxu0 %v343
    %v415 = vpop.f32.mrb[0].mxu0
    %v416 = vadd.f32 %v339, %v415
    %v417 = vpop.f32.mrb[0].mxu0
    %418 = vdwg.mxu0
    %v419 = vxor.u32 %v416, 2147483648
    %v420 = vmul.f32 %v419, 1.442695
    %v421 = vpow.pop %v420
    %v422 = vadd.f32 %v421, 1.0
    %v423 = vrcp.pop %v422
    %v424 = vmul.f32 1.0, %v423
    %v425 = vlaneseq
    %v426 = vshrl.u32 %v425, 7
    %v427 = vsub.s32 0, %v426
    %v428 = vrot.slane %v424, %v427
    %430 = vbcast.lane.b32.xlu0 %v428, 256
    %v431 = vpop.permute.xlu0 %430
    %s433 = sor.u32 256, 8
    %434 = vbcast.lane.b32.xlu0 %v428, %s433
    %v435 = vpop.permute.xlu0 %434
    %s437 = sor.u32 256, 16
    %438 = vbcast.lane.b32.xlu0 %v428, %s437
    %v439 = vpop.permute.xlu0 %438
    %s441 = sor.u32 256, 24
    %442 = vbcast.lane.b32.xlu0 %v428, %s441
    %v443 = vpop.permute.xlu0 %442
    %s445 = sor.u32 256, 32
    %446 = vbcast.lane.b32.xlu0 %v428, %s445
    %v447 = vpop.permute.xlu0 %446
    %s449 = sor.u32 256, 40
    %450 = vbcast.lane.b32.xlu0 %v428, %s449
    %v451 = vpop.permute.xlu0 %450
    %s453 = sor.u32 256, 48
    %454 = vbcast.lane.b32.xlu0 %v428, %s453
    %v455 = vpop.permute.xlu0 %454
    %s457 = sor.u32 256, 56
    %458 = vbcast.lane.b32.xlu0 %v428, %s457
    %v459 = vpop.permute.xlu0 %458
    %v460 = vlaneseq
    %v461 = vshrl.u32 %v460, 7
    %v462 = vsub.s32 1, %v461
    %v463 = vrot.slane %v424, %v462
    %465 = vbcast.lane.b32.xlu0 %v463, 256
    %v466 = vpop.permute.xlu0 %465
    %s468 = sor.u32 256, 8
    %469 = vbcast.lane.b32.xlu0 %v463, %s468
    %v470 = vpop.permute.xlu0 %469
    %s472 = sor.u32 256, 16
    %473 = vbcast.lane.b32.xlu0 %v463, %s472
    %v474 = vpop.permute.xlu0 %473
    %s476 = sor.u32 256, 24
    %477 = vbcast.lane.b32.xlu0 %v463, %s476
    %v478 = vpop.permute.xlu0 %477
    %s480 = sor.u32 256, 32
    %481 = vbcast.lane.b32.xlu0 %v463, %s480
    %v482 = vpop.permute.xlu0 %481
    %s484 = sor.u32 256, 40
    %485 = vbcast.lane.b32.xlu0 %v463, %s484
    %v486 = vpop.permute.xlu0 %485
    %s488 = sor.u32 256, 48
    %489 = vbcast.lane.b32.xlu0 %v463, %s488
    %v490 = vpop.permute.xlu0 %489
    %s492 = sor.u32 256, 56
    %493 = vbcast.lane.b32.xlu0 %v463, %s492
    %v494 = vpop.permute.xlu0 %493
    %v495 = vmul.f32 %v35, %v431
    %v496 = vmul.f32 %v36, %v431
    %v497 = vmul.f32 %v37, %v435
    %v498 = vmul.f32 %v38, %v435
    %v499 = vmul.f32 %v39, %v439
    %v500 = vmul.f32 %v40, %v439
    %v501 = vmul.f32 %v41, %v443
    %v502 = vmul.f32 %v42, %v443
    %v503 = vmul.f32 %v43, %v447
    %v504 = vmul.f32 %v44, %v447
    %v505 = vmul.f32 %v45, %v451
    %v506 = vmul.f32 %v46, %v451
    %v507 = vmul.f32 %v47, %v455
    %v508 = vmul.f32 %v48, %v455
    %v509 = vmul.f32 %v49, %v459
    %v510 = vmul.f32 %v50, %v459
    %v511 = vmul.f32 %v51, %v466
    %v512 = vmul.f32 %v52, %v466
    %v513 = vmul.f32 %v53, %v470
    %v514 = vmul.f32 %v54, %v470
    %v515 = vmul.f32 %v55, %v474
    %v516 = vmul.f32 %v56, %v474
    %v517 = vmul.f32 %v57, %v478
    %v518 = vmul.f32 %v58, %v478
    %v519 = vmul.f32 %v59, %v482
    %v520 = vmul.f32 %v60, %v482
    %v521 = vmul.f32 %v61, %v486
    %v522 = vmul.f32 %v62, %v486
    %v523 = vmul.f32 %v63, %v490
    %v524 = vmul.f32 %v64, %v490
    %v525 = vmul.f32 %v65, %v494
    %v526 = vmul.f32 %v66, %v494
    %527 = vst [vmem:[#allocation5] sm:$0xff] %v495
    %528 = vst [vmem:[#allocation5 + $0x8] sm:$0xff] %v496
    %529 = vst [vmem:[#allocation5 + $0x10] sm:$0xff] %v497
    %530 = vst [vmem:[#allocation5 + $0x18] sm:$0xff] %v498
    %531 = vst [vmem:[#allocation5 + $0x20] sm:$0xff] %v499
    %532 = vst [vmem:[#allocation5 + $0x28] sm:$0xff] %v500
    %533 = vst [vmem:[#allocation5 + $0x30] sm:$0xff] %v501
    %534 = vst [vmem:[#allocation5 + $0x38] sm:$0xff] %v502
    %535 = vst [vmem:[#allocation5 + $0x40] sm:$0xff] %v503
    %536 = vst [vmem:[#allocation5 + $0x48] sm:$0xff] %v504
    %537 = vst [vmem:[#allocation5 + $0x50] sm:$0xff] %v505
    %538 = vst [vmem:[#allocation5 + $0x58] sm:$0xff] %v506
    %539 = vst [vmem:[#allocation5 + $0x60] sm:$0xff] %v507
    %540 = vst [vmem:[#allocation5 + $0x68] sm:$0xff] %v508
    %541 = vst [vmem:[#allocation5 + $0x70] sm:$0xff] %v509
    %542 = vst [vmem:[#allocation5 + $0x78] sm:$0xff] %v510
    %543 = vst [vmem:[#allocation5 + $0x80] sm:$0xff] %v511
    %544 = vst [vmem:[#allocation5 + $0x88] sm:$0xff] %v512
    %545 = vst [vmem:[#allocation5 + $0x90] sm:$0xff] %v513
    %546 = vst [vmem:[#allocation5 + $0x98] sm:$0xff] %v514
    %547 = vst [vmem:[#allocation5 + $0xa0] sm:$0xff] %v515
    %548 = vst [vmem:[#allocation5 + $0xa8] sm:$0xff] %v516
    %549 = vst [vmem:[#allocation5 + $0xb0] sm:$0xff] %v517
    %550 = vst [vmem:[#allocation5 + $0xb8] sm:$0xff] %v518
    %551 = vst [vmem:[#allocation5 + $0xc0] sm:$0xff] %v519
    %552 = vst [vmem:[#allocation5 + $0xc8] sm:$0xff] %v520
    %553 = vst [vmem:[#allocation5 + $0xd0] sm:$0xff] %v521
    %554 = vst [vmem:[#allocation5 + $0xd8] sm:$0xff] %v522
    %555 = vst [vmem:[#allocation5 + $0xe0] sm:$0xff] %v523
    %556 = vst [vmem:[#allocation5 + $0xe8] sm:$0xff] %v524
    %557 = vst [vmem:[#allocation5 + $0xf0] sm:$0xff] %v525
    %558 = vst [vmem:[#allocation5 + $0xf8] sm:$0xff] %v526
    // Predicated region
    $region26: #{tpu_custom_call.1} parent=1 // pred_check
      _
    $region27: #{tpu_custom_call.1} parent=1 // pred_check_branch
      %560 = sbr.rel (0) target = $region29
    $region28: #{tpu_custom_call.1} parent=1 // pred_region
      %s562 = ssub.s32 4096, 4096
      %563 = vsyncadd [#allocation4], %s562
      %s564 = sshll.u32 [#allocation5], 4
      %s565 = int_to_ptr.vmem [resolvable:$true] %s564
      %570 = dma.vmem_to_hbm [thread:$0]  %s565, 4096, %s5, [#allocation4], 256, 256, 16
    $region29: #{tpu_custom_call.1} parent=1 // pred_fallthru
      _
    // Predicated region
    $region30: #{tpu_custom_call.1} parent=1 // pred_check
      _
    $region31: #{tpu_custom_call.1} parent=1 // pred_check_branch
      %572 = sbr.rel (0) target = $region33
    $region32: #{tpu_custom_call.1} parent=1 // pred_region
      %573 = dma.done [#allocation4], 4096
    $region33: #{tpu_custom_call.1} parent=1 // pred_fallthru
      _
    %574 = vsyncpa [#allocation3], 1
    %575 = vsyncpa [#allocation4], 1

// kernel: tpu_custom_call.1
$region0: #{tpu_custom_call.1}
  #allocation0 [shape = 'u32[]', space=smem, size = 0x4, offset = 0x4, fixed_abs, tag = 'smem constant byte address 0x4 - core index']
  #allocation1 [shape = 'u32[144,128]{1,0:T(1,128)}', space=vmem, size = 0x12000, scoped, tag = 'internal scratch']
  %s0 = inlined_call_operand.hbm [shape: f32[2,64,256], index: 0, kind: input, shape index: {}]
  %s1 = inlined_call_operand.vmem [shape: f32[64,12], index: 1, kind: input, shape index: {}]
  %s2 = inlined_call_operand.vmem [shape: f32[1,12], index: 2, kind: input, shape index: {}]
  %s3 = inlined_call_operand.vmem [shape: f32[12,64], index: 3, kind: input, shape index: {}]
  %s4 = inlined_call_operand.vmem [shape: f32[1,64], index: 4, kind: input, shape index: {}]
  %s5 = inlined_call_operand.hbm [shape: f32[2,64,256], index: 5, kind: output, shape index: {}]
  %s6 = sld [smem:[#allocation0]]
  $region34: #{tpu_custom_call.1} parent=0
    _
  %s8 = ssub.s32 1, %s6
  %s9 = scalar_select 0, %s8, %s6
  $region1: #{tpu_custom_call.1} parent=0
    #allocation2 [shape = 'u8[131072]{0}', space=vmem, size = 0x20000, scoped, tag = 'input window, operand 0, single buffered']
    #allocation3 [shape = 's32[1]{0}', space=sflag, size = 0x4, scoped, tag = 'scoped memory for tpu_custom_call.1']
    #allocation4 [shape = 's32[1]{0}', space=sflag, size = 0x4, scoped, tag = 'scoped memory for tpu_custom_call.1']
    #allocation5 [shape = 'u8[131072]{0}', space=vmem, size = 0x20000, scoped, tag = 'output window, operand 0, single buffered']
    %10 = vsyncpa [#allocation3], 0
    %11 = vsyncpa [#allocation4], 0
    // Predicated region
    $region2: #{tpu_custom_call.1} parent=1 // pred_check
      _
    $region3: #{tpu_custom_call.1} parent=1 // pred_check_branch
      %13 = sbr.rel (0) target = $region5
    $region4: #{tpu_custom_call.1} parent=1 // pred_region
      %s15 = ssub.s32 4096, 4096
      %16 = vsyncadd [#allocation3], %s15
      %s17 = sshll.u32 [#allocation2], 4
      %s18 = int_to_ptr.vmem [resolvable:$true] %s17
      %23 = dma.hbm_to_vmem [thread:$0]  %s0, 4096, %s18, [#allocation3], 256, 256, 16
    $region5: #{tpu_custom_call.1} parent=1 // pred_fallthru
      _
    // Predicated region
    $region6: #{tpu_custom_call.1} parent=1 // pred_check
      _
    $region7: #{tpu_custom_call.1} parent=1 // pred_check_branch
      %25 = sbr.rel (0) target = $region9
    $region8: #{tpu_custom_call.1} parent=1 // pred_region
      _
    $region9: #{tpu_custom_call.1} parent=1 // pred_fallthru
      _
    // Predicated region
    $region10: #{tpu_custom_call.1} parent=1 // pred_check
      _
    $region11: #{tpu_custom_call.1} parent=1 // pred_check_branch
      %27 = sbr.rel (0) target = $region13
    $region12: #{tpu_custom_call.1} parent=1 // pred_region
      _
    $region13: #{tpu_custom_call.1} parent=1 // pred_fallthru
      _
    // Predicated region
    $region14: #{tpu_custom_call.1} parent=1 // pred_check
      _
    $region15: #{tpu_custom_call.1} parent=1 // pred_check_branch
      %29 = sbr.rel (0) target = $region17
    $region16: #{tpu_custom_call.1} parent=1 // pred_region
      _
    $region17: #{tpu_custom_call.1} parent=1 // pred_fallthru
      _
    // Predicated region
    $region18: #{tpu_custom_call.1} parent=1 // pred_check
      _
    $region19: #{tpu_custom_call.1} parent=1 // pred_check_branch
      %31 = sbr.rel (0) target = $region21
    $region20: #{tpu_custom_call.1} parent=1 // pred_region
      _
    $region21: #{tpu_custom_call.1} parent=1 // pred_fallthru
      _
    // Predicated region
    $region22: #{tpu_custom_call.1} parent=1 // pred_check
      _
    $region23: #{tpu_custom_call.1} parent=1 // pred_check_branch
      %33 = sbr.rel (0) target = $region25
    $region24: #{tpu_custom_call.1} parent=1 // pred_region
      %34 = dma.done [#allocation3], 4096
    $region25: #{tpu_custom_call.1} parent=1 // pred_fallthru
      _
    %v35 = vld [vmem:[#allocation2] sm:$0xff]
    %v36 = vld [vmem:[#allocation2 + $0x8] sm:$0xff]
    %v37 = vld [vmem:[#allocation2 + $0x10] sm:$0xff]
    %v38 = vld [vmem:[#allocation2 + $0x18] sm:$0xff]
    %v39 = vld [vmem:[#allocation2 + $0x20] sm:$0xff]
    %v40 = vld [vmem:[#allocation2 + $0x28] sm:$0xff]
    %v41 = vld [vmem:[#allocation2 + $0x30] sm:$0xff]
    %v42 = vld [vmem:[#allocation2 + $0x38] sm:$0xff]
    %v43 = vld [vmem:[#allocation2 + $0x40] sm:$0xff]
    %v44 = vld [vmem:[#allocation2 + $0x48] sm:$0xff]
    %v45 = vld [vmem:[#allocation2 + $0x50] sm:$0xff]
    %v46 = vld [vmem:[#allocation2 + $0x58] sm:$0xff]
    %v47 = vld [vmem:[#allocation2 + $0x60] sm:$0xff]
    %v48 = vld [vmem:[#allocation2 + $0x68] sm:$0xff]
    %v49 = vld [vmem:[#allocation2 + $0x70] sm:$0xff]
    %v50 = vld [vmem:[#allocation2 + $0x78] sm:$0xff]
    %v51 = vld [vmem:[#allocation2 + $0x80] sm:$0xff]
    %v52 = vld [vmem:[#allocation2 + $0x88] sm:$0xff]
    %v53 = vld [vmem:[#allocation2 + $0x90] sm:$0xff]
    %v54 = vld [vmem:[#allocation2 + $0x98] sm:$0xff]
    %v55 = vld [vmem:[#allocation2 + $0xa0] sm:$0xff]
    %v56 = vld [vmem:[#allocation2 + $0xa8] sm:$0xff]
    %v57 = vld [vmem:[#allocation2 + $0xb0] sm:$0xff]
    %v58 = vld [vmem:[#allocation2 + $0xb8] sm:$0xff]
    %v59 = vld [vmem:[#allocation2 + $0xc0] sm:$0xff]
    %v60 = vld [vmem:[#allocation2 + $0xc8] sm:$0xff]
    %v61 = vld [vmem:[#allocation2 + $0xd0] sm:$0xff]
    %v62 = vld [vmem:[#allocation2 + $0xd8] sm:$0xff]
    %v63 = vld [vmem:[#allocation2 + $0xe0] sm:$0xff]
    %v64 = vld [vmem:[#allocation2 + $0xe8] sm:$0xff]
    %v65 = vld [vmem:[#allocation2 + $0xf0] sm:$0xff]
    %v66 = vld [vmem:[#allocation2 + $0xf8] sm:$0xff]
    %v67 = vadd.f32 %v35, %v36
    %68 = vadd.xlane.f32.xlu0 %v67
    %v69 = vpop.xlane.xlu0 %68
    %v70 = vadd.f32 %v37, %v38
    %71 = vadd.xlane.f32.xlu0 %v70
    %v72 = vpop.xlane.xlu0 %71
    %v73 = vadd.f32 %v39, %v40
    %74 = vadd.xlane.f32.xlu0 %v73
    %v75 = vpop.xlane.xlu0 %74
    %v76 = vadd.f32 %v41, %v42
    %77 = vadd.xlane.f32.xlu0 %v76
    %v78 = vpop.xlane.xlu0 %77
    %v79 = vadd.f32 %v43, %v44
    %80 = vadd.xlane.f32.xlu0 %v79
    %v81 = vpop.xlane.xlu0 %80
    %v82 = vadd.f32 %v45, %v46
    %83 = vadd.xlane.f32.xlu0 %v82
    %v84 = vpop.xlane.xlu0 %83
    %v85 = vadd.f32 %v47, %v48
    %86 = vadd.xlane.f32.xlu0 %v85
    %v87 = vpop.xlane.xlu0 %86
    %v88 = vadd.f32 %v49, %v50
    %89 = vadd.xlane.f32.xlu0 %v88
    %v90 = vpop.xlane.xlu0 %89
    %v91 = vadd.f32 %v51, %v52
    %92 = vadd.xlane.f32.xlu0 %v91
    %v93 = vpop.xlane.xlu0 %92
    %v94 = vadd.f32 %v53, %v54
    %95 = vadd.xlane.f32.xlu0 %v94
    %v96 = vpop.xlane.xlu0 %95
    %v97 = vadd.f32 %v55, %v56
    %98 = vadd.xlane.f32.xlu0 %v97
    %v99 = vpop.xlane.xlu0 %98
    %v100 = vadd.f32 %v57, %v58
    %101 = vadd.xlane.f32.xlu0 %v100
    %v102 = vpop.xlane.xlu0 %101
    %v103 = vadd.f32 %v59, %v60
    %104 = vadd.xlane.f32.xlu0 %v103
    %v105 = vpop.xlane.xlu0 %104
    %v106 = vadd.f32 %v61, %v62
    %107 = vadd.xlane.f32.xlu0 %v106
    %v108 = vpop.xlane.xlu0 %107
    %v109 = vadd.f32 %v63, %v64
    %110 = vadd.xlane.f32.xlu0 %v109
    %v111 = vpop.xlane.xlu0 %110
    %v112 = vadd.f32 %v65, %v66
    %113 = vadd.xlane.f32.xlu0 %v112
    %v114 = vpop.xlane.xlu0 %113
    %v115 = vmul.f32 %v69, 0.00390625
    %v116 = vmul.f32 %v72, 0.00390625
    %v117 = vmul.f32 %v75, 0.00390625
    %v118 = vmul.f32 %v78, 0.00390625
    %v119 = vmul.f32 %v81, 0.00390625
    %v120 = vmul.f32 %v84, 0.00390625
    %v121 = vmul.f32 %v87, 0.00390625
    %v122 = vmul.f32 %v90, 0.00390625
    %v123 = vmul.f32 %v93, 0.00390625
    %v124 = vmul.f32 %v96, 0.00390625
    %v125 = vmul.f32 %v99, 0.00390625
    %v126 = vmul.f32 %v102, 0.00390625
    %v127 = vmul.f32 %v105, 0.00390625
    %v128 = vmul.f32 %v108, 0.00390625
    %v129 = vmul.f32 %v111, 0.00390625
    %v130 = vmul.f32 %v114, 0.00390625
    %v131 = vld [vmem:[%s1] sm:$0xff]
    %v132 = vld [vmem:[%s1 + $0x8] sm:$0xff]
    %v133 = vld [vmem:[%s1 + $0x10] sm:$0xff]
    %v134 = vld [vmem:[%s1 + $0x18] sm:$0xff]
    %v135 = vld [vmem:[%s1 + $0x20] sm:$0xff]
    %v136 = vld [vmem:[%s1 + $0x28] sm:$0xff]
    %v137 = vld [vmem:[%s1 + $0x30] sm:$0xff]
    %v138 = vld [vmem:[%s1 + $0x38] sm:$0xff]
    %v139 = vld [vmem:[%s2] sm:$0x1]
    %v141 = vlaneseq
    %v142 = vshrl.u32 %v141, 7
    %v143 = vsub.s32 0, %v142
    %v144 = vrot.slane %v139, %v143
    %v162 = vlaneseq
    %v163 = vand.u32 %v162, 127
    %v164 = vlaneseq
    %v165 = vshrl.u32 %v164, 7
    %v166 = vsub.s32 %v163, %v165
    %v167 = vrot.slane %v115, %v166
    %v168 = vadd.s32 %v163, 4294967288
    %v169 = vlaneseq
    %v170 = vshrl.u32 %v169, 7
    %v171 = vsub.s32 %v168, %v170
    %v172 = vrot.slane %v116, %v171
    %vm173 = vcmask 130112
    %v174 = vsel %vm173, %v172, %v167
    %v175 = vadd.s32 %v163, 4294967280
    %v176 = vlaneseq
    %v177 = vshrl.u32 %v176, 7
    %v178 = vsub.s32 %v175, %v177
    %v179 = vrot.slane %v117, %v178
    %vm180 = vcmask 195712
    %v181 = vsel %vm180, %v179, %v174
    %v182 = vadd.s32 %v163, 4294967272
    %v183 = vlaneseq
    %v184 = vshrl.u32 %v183, 7
    %v185 = vsub.s32 %v182, %v184
    %v186 = vrot.slane %v118, %v185
    %vm187 = vcmask 261312
    %v188 = vsel %vm187, %v186, %v181
    %v189 = vadd.s32 %v163, 4294967264
    %v190 = vlaneseq
    %v191 = vshrl.u32 %v190, 7
    %v192 = vsub.s32 %v189, %v191
    %v193 = vrot.slane %v119, %v192
    %vm194 = vcmask 326912
    %v195 = vsel %vm194, %v193, %v188
    %v196 = vadd.s32 %v163, 4294967256
    %v197 = vlaneseq
    %v198 = vshrl.u32 %v197, 7
    %v199 = vsub.s32 %v196, %v198
    %v200 = vrot.slane %v120, %v199
    %vm201 = vcmask 392512
    %v202 = vsel %vm201, %v200, %v195
    %v203 = vadd.s32 %v163, 4294967248
    %v204 = vlaneseq
    %v205 = vshrl.u32 %v204, 7
    %v206 = vsub.s32 %v203, %v205
    %v207 = vrot.slane %v121, %v206
    %vm208 = vcmask 458112
    %v209 = vsel %vm208, %v207, %v202
    %v210 = vadd.s32 %v163, 4294967240
    %v211 = vlaneseq
    %v212 = vshrl.u32 %v211, 7
    %v213 = vsub.s32 %v210, %v212
    %v214 = vrot.slane %v122, %v213
    %vm215 = vcmask 523712
    %v216 = vsel %vm215, %v214, %v209
    %v217 = vlaneseq
    %v218 = vshrl.u32 %v217, 7
    %v219 = vsub.s32 %v163, %v218
    %v220 = vrot.slane %v123, %v219
    %v221 = vlaneseq
    %v222 = vshrl.u32 %v221, 7
    %v223 = vsub.s32 %v168, %v222
    %v224 = vrot.slane %v124, %v223
    %v225 = vsel %vm173, %v224, %v220
    %v226 = vlaneseq
    %v227 = vshrl.u32 %v226, 7
    %v228 = vsub.s32 %v175, %v227
    %v229 = vrot.slane %v125, %v228
    %v230 = vsel %vm180, %v229, %v225
    %v231 = vlaneseq
    %v232 = vshrl.u32 %v231, 7
    %v233 = vsub.s32 %v182, %v232
    %v234 = vrot.slane %v126, %v233
    %v235 = vsel %vm187, %v234, %v230
    %v236 = vlaneseq
    %v237 = vshrl.u32 %v236, 7
    %v238 = vsub.s32 %v189, %v237
    %v239 = vrot.slane %v127, %v238
    %v240 = vsel %vm194, %v239, %v235
    %v241 = vlaneseq
    %v242 = vshrl.u32 %v241, 7
    %v243 = vsub.s32 %v196, %v242
    %v244 = vrot.slane %v128, %v243
    %v245 = vsel %vm201, %v244, %v240
    %v246 = vlaneseq
    %v247 = vshrl.u32 %v246, 7
    %v248 = vsub.s32 %v203, %v247
    %v249 = vrot.slane %v129, %v248
    %v250 = vsel %vm208, %v249, %v245
    %v251 = vlaneseq
    %v252 = vshrl.u32 %v251, 7
    %v253 = vsub.s32 %v210, %v252
    %v254 = vrot.slane %v130, %v253
    %v255 = vsel %vm215, %v254, %v250
    %vm256 = vcmask 1041409
    %v257 = vsel %vm256, %v255, %v216
    %vm258 = vcmask 523264
    %v259 = vsel %vm258, %v257, 0
    %261 = vmatprep.subr.mxu0 0.0
    %262 = vmatpush1.msra.mxu0 %v131
    %263 = vmatprep.subr.mxu0 0.0
    %264 = vmatpush1.msra.mxu0 %v132
    %265 = vmatprep.subr.mxu0 0.0
    %266 = vmatpush1.msra.mxu0 %v133
    %267 = vmatprep.subr.mxu0 0.0
    %268 = vmatpush1.msra.mxu0 %v134
    %269 = vmatprep.subr.mxu0 0.0
    %270 = vmatpush1.msra.mxu0 %v135
    %271 = vmatprep.subr.mxu0 0.0
    %272 = vmatpush1.msra.mxu0 %v136
    %273 = vmatprep.subr.mxu0 0.0
    %274 = vmatpush1.msra.mxu0 %v137
    %275 = vmatprep.subr.mxu0 0.0
    %276 = vmatpush1.msra.mxu0 %v138
    %277 = vmatprep.subr.mxu0 0.0
    %278 = vmatpush1.msra.mxu0 0.0
    %279 = vmatprep.subr.mxu0 0.0
    %280 = vmatpush1.msra.mxu0 0.0
    %281 = vmatprep.subr.mxu0 0.0
    %282 = vmatpush1.msra.mxu0 0.0
    %283 = vmatprep.subr.mxu0 0.0
    %284 = vmatpush1.msra.mxu0 0.0
    %285 = vmatprep.subr.mxu0 0.0
    %286 = vmatpush1.msra.mxu0 0.0
    %287 = vmatprep.subr.mxu0 0.0
    %288 = vmatpush1.msra.mxu0 0.0
    %289 = vmatprep.subr.mxu0 0.0
    %290 = vmatpush1.msra.mxu0 0.0
    %291 = vmatprep.subr.mxu0 0.0
    %292 = vmatpush1.msra.mxu0 0.0
    %293 = vmatprep.subr.mxu0 0.0
    %294 = vmatpush1.msra.mxu0 0.0
    %295 = vmatprep.subr.mxu0 0.0
    %296 = vmatpush1.msra.mxu0 0.0
    %297 = vmatprep.subr.mxu0 0.0
    %298 = vmatpush1.msra.mxu0 0.0
    %299 = vmatprep.subr.mxu0 0.0
    %300 = vmatpush1.msra.mxu0 0.0
    %301 = vmatprep.subr.mxu0 0.0
    %302 = vmatpush1.msra.mxu0 0.0
    %303 = vmatprep.subr.mxu0 0.0
    %304 = vmatpush1.msra.mxu0 0.0
    %305 = vmatprep.subr.mxu0 0.0
    %306 = vmatpush1.msra.mxu0 0.0
    %307 = vmatprep.subr.mxu0 0.0
    %308 = vmatpush1.msra.mxu0 0.0
    %309 = vmatprep.subr.mxu0 0.0
    %310 = vmatpush1.msra.mxu0 0.0
    %311 = vmatprep.subr.mxu0 0.0
    %312 = vmatpush1.msra.mxu0 0.0
    %313 = vmatprep.subr.mxu0 0.0
    %314 = vmatpush1.msra.mxu0 0.0
    %315 = vmatprep.subr.mxu0 0.0
    %316 = vmatpush1.msra.mxu0 0.0
    %317 = vmatprep.subr.mxu0 0.0
    %318 = vmatpush1.msra.mxu0 0.0
    %319 = vmatprep.subr.mxu0 0.0
    %320 = vmatpush1.msra.mxu0 0.0
    %321 = vmatprep.subr.mxu0 0.0
    %322 = vmatpush1.msra.mxu0 0.0
    %323 = vmatprep.subr.mxu0 0.0
    %324 = vmatpush1.msra.mxu0 0.0
    %325 = vmatprep.mubr.f32.mxu0 0.0
    %326 = vmatmul.mubr.f32.gmra.mrb[0].mxu0 %v259
    %v327 = vpop.f32.mrb[0].mxu0
    %v328 = vadd.f32 %v144, %v327
    %v329 = vpop.f32.mrb[0].mxu0
    %330 = vdwg.mxu0
    %v331 = vmax.f32 %v328, 0.0
    %v332 = vld [vmem:[%s3] sm:$0xff]
    %v333 = vld [vmem:[%s3 + $0x8] sm:$0xf]
    %v334 = vld [vmem:[%s4] sm:$0x1]
    %v336 = vlaneseq
    %v337 = vshrl.u32 %v336, 7
    %v338 = vsub.s32 0, %v337
    %v339 = vrot.slane %v334, %v338
    %vm341 = vcmask 97280
    %v343 = vsel %vm341, %v331, 0
    %vm345 = vcmask 1043456
    %v347 = vsel %vm345, %v333, 0
    %349 = vmatprep.subr.mxu0 0.0
    %350 = vmatpush1.msra.mxu0 %v332
    %351 = vmatprep.subr.mxu0 0.0
    %352 = vmatpush1.msra.mxu0 %v347
    %353 = vmatprep.subr.mxu0 0.0
    %354 = vmatpush1.msra.mxu0 0.0
    %355 = vmatprep.subr.mxu0 0.0
    %356 = vmatpush1.msra.mxu0 0.0
    %357 = vmatprep.subr.mxu0 0.0
    %358 = vmatpush1.msra.mxu0 0.0
    %359 = vmatprep.subr.mxu0 0.0
    %360 = vmatpush1.msra.mxu0 0.0
    %361 = vmatprep.subr.mxu0 0.0
    %362 = vmatpush1.msra.mxu0 0.0
    %363 = vmatprep.subr.mxu0 0.0
    %364 = vmatpush1.msra.mxu0 0.0
    %365 = vmatprep.subr.mxu0 0.0
    %366 = vmatpush1.msra.mxu0 0.0
    %367 = vmatprep.subr.mxu0 0.0
    %368 = vmatpush1.msra.mxu0 0.0
    %369 = vmatprep.subr.mxu0 0.0
    %370 = vmatpush1.msra.mxu0 0.0
    %371 = vmatprep.subr.mxu0 0.0
    %372 = vmatpush1.msra.mxu0 0.0
    %373 = vmatprep.subr.mxu0 0.0
    %374 = vmatpush1.msra.mxu0 0.0
    %375 = vmatprep.subr.mxu0 0.0
    %376 = vmatpush1.msra.mxu0 0.0
    %377 = vmatprep.subr.mxu0 0.0
    %378 = vmatpush1.msra.mxu0 0.0
    %379 = vmatprep.subr.mxu0 0.0
    %380 = vmatpush1.msra.mxu0 0.0
    %381 = vmatprep.subr.mxu0 0.0
    %382 = vmatpush1.msra.mxu0 0.0
    %383 = vmatprep.subr.mxu0 0.0
    %384 = vmatpush1.msra.mxu0 0.0
    %385 = vmatprep.subr.mxu0 0.0
    %386 = vmatpush1.msra.mxu0 0.0
    %387 = vmatprep.subr.mxu0 0.0
    %388 = vmatpush1.msra.mxu0 0.0
    %389 = vmatprep.subr.mxu0 0.0
    %390 = vmatpush1.msra.mxu0 0.0
    %391 = vmatprep.subr.mxu0 0.0
    %392 = vmatpush1.msra.mxu0 0.0
    %393 = vmatprep.subr.mxu0 0.0
    %394 = vmatpush1.msra.mxu0 0.0
    %395 = vmatprep.subr.mxu0 0.0
    %396 = vmatpush1.msra.mxu0 0.0
    %397 = vmatprep.subr.mxu0 0.0
    %398 = vmatpush1.msra.mxu0 0.0
    %399 = vmatprep.subr.mxu0 0.0
    %400 = vmatpush1.msra.mxu0 0.0
    %401 = vmatprep.subr.mxu0 0.0
    %402 = vmatpush1.msra.mxu0 0.0
    %403 = vmatprep.subr.mxu0 0.0
    %404 = vmatpush1.msra.mxu0 0.0
    %405 = vmatprep.subr.mxu0 0.0
    %406 = vmatpush1.msra.mxu0 0.0
    %407 = vmatprep.subr.mxu0 0.0
    %408 = vmatpush1.msra.mxu0 0.0
    %409 = vmatprep.subr.mxu0 0.0
    %410 = vmatpush1.msra.mxu0 0.0
    %411 = vmatprep.subr.mxu0 0.0
    %412 = vmatpush1.msra.mxu0 0.0
    %413 = vmatprep.mubr.f32.mxu0 0.0
    %414 = vmatmul.mubr.f32.gmra.mrb[0].mxu0 %v343
    %v415 = vpop.f32.mrb[0].mxu0
    %v416 = vadd.f32 %v339, %v415
    %v417 = vpop.f32.mrb[0].mxu0
    %418 = vdwg.mxu0
    %v419 = vxor.u32 %v416, 2147483648
    %v420 = vmul.f32 %v419, 1.442695
    %v421 = vpow.pop %v420
    %v422 = vadd.f32 %v421, 1.0
    %v423 = vrcp.pop %v422
    %v424 = vmul.f32 1.0, %v423
    %v425 = vlaneseq
    %v426 = vshrl.u32 %v425, 7
    %v427 = vsub.s32 0, %v426
    %v428 = vrot.slane %v424, %v427
    %430 = vbcast.lane.b32.xlu0 %v428, 256
    %v431 = vpop.permute.xlu0 %430
    %s433 = sor.u32 256, 8
    %434 = vbcast.lane.b32.xlu0 %v428, %s433
    %v435 = vpop.permute.xlu0 %434
    %s437 = sor.u32 256, 16
    %438 = vbcast.lane.b32.xlu0 %v428, %s437
    %v439 = vpop.permute.xlu0 %438
    %s441 = sor.u32 256, 24
    %442 = vbcast.lane.b32.xlu0 %v428, %s441
    %v443 = vpop.permute.xlu0 %442
    %s445 = sor.u32 256, 32
    %446 = vbcast.lane.b32.xlu0 %v428, %s445
    %v447 = vpop.permute.xlu0 %446
    %s449 = sor.u32 256, 40
    %450 = vbcast.lane.b32.xlu0 %v428, %s449
    %v451 = vpop.permute.xlu0 %450
    %s453 = sor.u32 256, 48
    %454 = vbcast.lane.b32.xlu0 %v428, %s453
    %v455 = vpop.permute.xlu0 %454
    %s457 = sor.u32 256, 56
    %458 = vbcast.lane.b32.xlu0 %v428, %s457
    %v459 = vpop.permute.xlu0 %458
    %v460 = vlaneseq
    %v461 = vshrl.u32 %v460, 7
    %v462 = vsub.s32 1, %v461
    %v463 = vrot.slane %v424, %v462
    %465 = vbcast.lane.b32.xlu0 %v463, 256
    %v466 = vpop.permute.xlu0 %465
    %s468 = sor.u32 256, 8
    %469 = vbcast.lane.b32.xlu0 %v463, %s468
    %v470 = vpop.permute.xlu0 %469
    %s472 = sor.u32 256, 16
    %473 = vbcast.lane.b32.xlu0 %v463, %s472
    %v474 = vpop.permute.xlu0 %473
    %s476 = sor.u32 256, 24
    %477 = vbcast.lane.b32.xlu0 %v463, %s476
    %v478 = vpop.permute.xlu0 %477
    %s480 = sor.u32 256, 32
    %481 = vbcast.lane.b32.xlu0 %v463, %s480
    %v482 = vpop.permute.xlu0 %481
    %s484 = sor.u32 256, 40
    %485 = vbcast.lane.b32.xlu0 %v463, %s484
    %v486 = vpop.permute.xlu0 %485
    %s488 = sor.u32 256, 48
    %489 = vbcast.lane.b32.xlu0 %v463, %s488
    %v490 = vpop.permute.xlu0 %489
    %s492 = sor.u32 256, 56
    %493 = vbcast.lane.b32.xlu0 %v463, %s492
    %v494 = vpop.permute.xlu0 %493
    %v495 = vmul.f32 %v35, %v431
    %v496 = vmul.f32 %v36, %v431
    %v497 = vmul.f32 %v37, %v435
    %v498 = vmul.f32 %v38, %v435
    %v499 = vmul.f32 %v39, %v439
    %v500 = vmul.f32 %v40, %v439
    %v501 = vmul.f32 %v41, %v443
    %v502 = vmul.f32 %v42, %v443
    %v503 = vmul.f32 %v43, %v447
    %v504 = vmul.f32 %v44, %v447
    %v505 = vmul.f32 %v45, %v451
    %v506 = vmul.f32 %v46, %v451
    %v507 = vmul.f32 %v47, %v455
    %v508 = vmul.f32 %v48, %v455
    %v509 = vmul.f32 %v49, %v459
    %v510 = vmul.f32 %v50, %v459
    %v511 = vmul.f32 %v51, %v466
    %v512 = vmul.f32 %v52, %v466
    %v513 = vmul.f32 %v53, %v470
    %v514 = vmul.f32 %v54, %v470
    %v515 = vmul.f32 %v55, %v474
    %v516 = vmul.f32 %v56, %v474
    %v517 = vmul.f32 %v57, %v478
    %v518 = vmul.f32 %v58, %v478
    %v519 = vmul.f32 %v59, %v482
    %v520 = vmul.f32 %v60, %v482
    %v521 = vmul.f32 %v61, %v486
    %v522 = vmul.f32 %v62, %v486
    %v523 = vmul.f32 %v63, %v490
    %v524 = vmul.f32 %v64, %v490
    %v525 = vmul.f32 %v65, %v494
    %v526 = vmul.f32 %v66, %v494
    %527 = vst [vmem:[#allocation5] sm:$0xff] %v495
    %528 = vst [vmem:[#allocation5 + $0x8] sm:$0xff] %v496
    %529 = vst [vmem:[#allocation5 + $0x10] sm:$0xff] %v497
    %530 = vst [vmem:[#allocation5 + $0x18] sm:$0xff] %v498
    %531 = vst [vmem:[#allocation5 + $0x20] sm:$0xff] %v499
    %532 = vst [vmem:[#allocation5 + $0x28] sm:$0xff] %v500
    %533 = vst [vmem:[#allocation5 + $0x30] sm:$0xff] %v501
    %534 = vst [vmem:[#allocation5 + $0x38] sm:$0xff] %v502
    %535 = vst [vmem:[#allocation5 + $0x40] sm:$0xff] %v503
    %536 = vst [vmem:[#allocation5 + $0x48] sm:$0xff] %v504
    %537 = vst [vmem:[#allocation5 + $0x50] sm:$0xff] %v505
    %538 = vst [vmem:[#allocation5 + $0x58] sm:$0xff] %v506
    %539 = vst [vmem:[#allocation5 + $0x60] sm:$0xff] %v507
    %540 = vst [vmem:[#allocation5 + $0x68] sm:$0xff] %v508
    %541 = vst [vmem:[#allocation5 + $0x70] sm:$0xff] %v509
    %542 = vst [vmem:[#allocation5 + $0x78] sm:$0xff] %v510
    %543 = vst [vmem:[#allocation5 + $0x80] sm:$0xff] %v511
    %544 = vst [vmem:[#allocation5 + $0x88] sm:$0xff] %v512
    %545 = vst [vmem:[#allocation5 + $0x90] sm:$0xff] %v513
    %546 = vst [vmem:[#allocation5 + $0x98] sm:$0xff] %v514
    %547 = vst [vmem:[#allocation5 + $0xa0] sm:$0xff] %v515
    %548 = vst [vmem:[#allocation5 + $0xa8] sm:$0xff] %v516
    %549 = vst [vmem:[#allocation5 + $0xb0] sm:$0xff] %v517
    %550 = vst [vmem:[#allocation5 + $0xb8] sm:$0xff] %v518
    %551 = vst [vmem:[#allocation5 + $0xc0] sm:$0xff] %v519
    %552 = vst [vmem:[#allocation5 + $0xc8] sm:$0xff] %v520
    %553 = vst [vmem:[#allocation5 + $0xd0] sm:$0xff] %v521
    %554 = vst [vmem:[#allocation5 + $0xd8] sm:$0xff] %v522
    %555 = vst [vmem:[#allocation5 + $0xe0] sm:$0xff] %v523
    %556 = vst [vmem:[#allocation5 + $0xe8] sm:$0xff] %v524
    %557 = vst [vmem:[#allocation5 + $0xf0] sm:$0xff] %v525
    %558 = vst [vmem:[#allocation5 + $0xf8] sm:$0xff] %v526
    // Predicated region
    $region26: #{tpu_custom_call.1} parent=1 // pred_check
      _
    $region27: #{tpu_custom_call.1} parent=1 // pred_check_branch
      %560 = sbr.rel (0) target = $region29
    $region28: #{tpu_custom_call.1} parent=1 // pred_region
      %s562 = ssub.s32 4096, 4096
      %563 = vsyncadd [#allocation4], %s562
      %s564 = sshll.u32 [#allocation5], 4
      %s565 = int_to_ptr.vmem [resolvable:$true] %s564
      %570 = dma.vmem_to_hbm [thread:$0]  %s565, 4096, %s5, [#allocation4], 256, 256, 16
    $region29: #{tpu_custom_call.1} parent=1 // pred_fallthru
      _
    // Predicated region
    $region30: #{tpu_custom_call.1} parent=1 // pred_check
      _
    $region31: #{tpu_custom_call.1} parent=1 // pred_check_branch
      %572 = sbr.rel (0) target = $region33
    $region32: #{tpu_custom_call.1} parent=1 // pred_region
      %573 = dma.done [#allocation4], 4096
    $region33: #{tpu_custom_call.1} parent=1 // pred_fallthru
      _
    %574 = vsyncpa [#allocation3], 1
    %575 = vsyncpa [#allocation4], 1

</llo_original>
